<compile_context>
chip_gen: v5e
topology: v5e:2x2
jax: 0.10.0
libtpu: 0.0.40
codegen_flags: <defaults>
</compile_context>

<pallas_src>
import jax
import jax.numpy as jnp
from jax.experimental import pallas as pl
from jax.experimental.pallas import tpu as pltpu


def _round_up(x, m):
    return (x + m - 1) // m * m


# ----- Kernel 1: feature projection  P = X @ W^T  (W pre-transposed outside) -----
def _proj_kernel(x_ref, wt_ref, p_ref):
    p_ref[...] = jnp.dot(
        x_ref[...], wt_ref[...], preferred_element_type=jnp.float32
    ).astype(p_ref.dtype)


# ----- Kernel 2: aggregation + bias  out = A @ P + b  (K-reduction over grid) -----
def _agg_kernel(a_ref, p_ref, b_ref, o_ref, acc_ref):
    k = pl.program_id(1)

    @pl.when(k == 0)
    def _():
        acc_ref[...] = jnp.zeros_like(acc_ref)

    # A tile is bf16 holding exact 0/1 values; promote to f32 so the
    # accumulation is full precision.
    acc_ref[...] += jnp.dot(
        a_ref[...].astype(jnp.float32), p_ref[...],
        preferred_element_type=jnp.float32,
    )

    @pl.when(k == pl.num_programs(1) - 1)
    def _():
        o_ref[...] = (acc_ref[...] + b_ref[...]).astype(o_ref.dtype)


def gcn_layer(adj, x, weight, bias, *, tile_n=256):
    """GCN layer forward.

    adj   : (N, N) f32 with adj[dst, src] = 1.0 for every edge src->dst
    x     : (N, in_feats) f32 node features
    weight: (out_feats, in_feats) f32  (torch.nn.Linear.weight layout)
    bias  : (out_feats,) f32
    returns (N, out_feats) f32
    """
    n, in_feats = x.shape
    out_feats = weight.shape[0]

    # ---- lane-dense / tile-friendly padding (zero padding -> numerically exact) ----
    in_fp = _round_up(in_feats, 128)
    out_fp = _round_up(out_feats, 128)
    tm = tk = min(tile_n, _round_up(n, 128))     # keep tiles <= 256 (v7x-safe)
    n_p = _round_up(n, tm)

    x_p = jnp.pad(x.astype(jnp.float32), ((0, n_p - n), (0, in_fp - in_feats)))
    # Pre-transpose W once at trace level (no per-tile in-kernel transpose).
    wt_p = jnp.pad(weight.astype(jnp.float32).T,
                   ((0, in_fp - in_feats), (0, out_fp - out_feats)))
    b_p = jnp.pad(bias.astype(jnp.float32),
                  (0, out_fp - out_feats)).reshape(1, out_fp)
    # bf16 adjacency: 0/1 is exactly representable -> lossless, halves HBM bytes.
    a_p = jnp.pad(adj.astype(jnp.float32),
                  ((0, n_p - n), (0, n_p - n))).astype(jnp.bfloat16)

    vmem_cap = 32 * 1024 * 1024  # explicit scoped limit, plenty of headroom

    # ---- 1) project features first (out_feats <= in_feats): P = X @ W^T ----
    proj = pl.pallas_call(
        _proj_kernel,
        out_shape=jax.ShapeDtypeStruct((n_p, out_fp), jnp.float32),
        grid_spec=pltpu.PrefetchScalarGridSpec(
            num_scalar_prefetch=0,
            grid=(n_p // tm,),
            in_specs=[
                pl.BlockSpec((tm, in_fp), lambda i: (i, 0)),     # X row tile
                pl.BlockSpec((in_fp, out_fp), lambda i: (0, 0)),  # W^T (resident)
            ],
            out_specs=pl.BlockSpec((tm, out_fp), lambda i: (i, 0)),
        ),
        compiler_params=pltpu.CompilerParams(
            dimension_semantics=("parallel",),
            vmem_limit_bytes=vmem_cap,
        ),
    )(x_p, wt_p)

    # ---- 2) aggregate over in-edges + bias: out = A @ P + b ----
    out_padded = pl.pallas_call(
        _agg_kernel,
        out_shape=jax.ShapeDtypeStruct((n_p, out_fp), jnp.float32),
        grid_spec=pltpu.PrefetchScalarGridSpec(
            num_scalar_prefetch=0,
            grid=(n_p // tm, n_p // tk),
            in_specs=[
                pl.BlockSpec((tm, tk), lambda i, k: (i, k)),       # A tile (bf16)
                pl.BlockSpec((tk, out_fp), lambda i, k: (k, 0)),   # projected feats
                pl.BlockSpec((1, out_fp), lambda i, k: (0, 0)),    # bias row
            ],
            out_specs=pl.BlockSpec((tm, out_fp), lambda i, k: (i, 0)),
            scratch_shapes=[pltpu.VMEM((tm, out_fp), jnp.float32)],
        ),
        compiler_params=pltpu.CompilerParams(
            dimension_semantics=("parallel", "arbitrary"),
            vmem_limit_bytes=vmem_cap,
        ),
    )(a_p, proj, b_p)

    return out_padded[:n, :out_feats]


if __name__ == "__main__":
    # Small deterministic problem: 8 nodes, in_feats=32, out_feats=16.
    N, IN_FEATS, OUT_FEATS = 8, 32, 16

    key = jax.random.PRNGKey(0)
    k_x, k_w, k_b = jax.random.split(key, 3)

    # Node features.
    x = jax.random.normal(k_x, (N, IN_FEATS), dtype=jnp.float32)

    # Deterministic small graph: ring + a couple of chords. Edge (src -> dst).
    edges = [(i, (i + 1) % N) for i in range(N)] + [(0, 4), (2, 6), (5, 1)]
    adj = jnp.zeros((N, N), dtype=jnp.float32)
    for src, dst in edges:
        adj = adj.at[dst, src].set(1.0)  # A[dst, src] = 1  => h = A @ x

    # nn.Linear init: U(-1/sqrt(in_feats), 1/sqrt(in_feats)) for weight and bias.
    bound = 1.0 / jnp.sqrt(jnp.float32(IN_FEATS))
    weight = jax.random.uniform(k_w, (OUT_FEATS, IN_FEATS),
                                minval=-bound, maxval=bound, dtype=jnp.float32)
    bias = jax.random.uniform(k_b, (OUT_FEATS,),
                              minval=-bound, maxval=bound, dtype=jnp.float32)

    out = gcn_layer(adj, x, weight, bias)
    jax.block_until_ready(out)

    # Reference check in plain JAX (same math, original association).
    ref = (adj @ x) @ weight.T + bias
    assert out.shape == (N, OUT_FEATS)
    assert jnp.allclose(out, ref, atol=1e-3, rtol=1e-3), (
        float(jnp.max(jnp.abs(out - ref))))

    print("KERNEL_OK")
</pallas_src>

<mosaic_0001>
module attributes {stable_mosaic.version = 11 : i64} {
  func.func @_proj_kernel(%arg0: i32, %arg1: memref<128x128xf32, #tpu.memory_space<vmem>>, %arg2: memref<128x128xf32, #tpu.memory_space<vmem>>, %arg3: memref<128x128xf32, #tpu.memory_space<vmem>>) attributes {dimension_semantics = [#tpu.dimension_semantics<parallel>], iteration_bounds = array<i64: 1>, scalar_prefetch = 0 : i64, scratch_operands = 0 : i64, tpu.core_type = #tpu.core_type<tc>, window_params = [{transform_indices = @transform_0, window_bounds = array<i64: 128, 128>}, {pipeline_mode = #tpu.pipeline_mode<synchronous>, transform_indices = @transform_1, window_bounds = array<i64: 128, 128>}, {transform_indices = @transform_2, window_bounds = array<i64: 128, 128>}]} {
    %c0 = arith.constant 0 : index
    %c0_0 = arith.constant 0 : index
    %0 = vector.load %arg1[%c0, %c0_0] : memref<128x128xf32, #tpu.memory_space<vmem>>, vector<128x128xf32>
    %c0_1 = arith.constant 0 : index
    %c0_2 = arith.constant 0 : index
    %1 = vector.load %arg2[%c0_1, %c0_2] : memref<128x128xf32, #tpu.memory_space<vmem>>, vector<128x128xf32>
    %cst = arith.constant dense<0.000000e+00> : vector<128x128xf32>
    %2 = tpu.matmul %0, %1, %cst {dimension_numbers = #tpu.dot_dimension_numbers<[1], [0], [0], [1], [0, 0, 1, 1], [], []>} : vector<128x128xf32>, vector<128x128xf32>, vector<128x128xf32> -> vector<128x128xf32>
    %c0_3 = arith.constant 0 : index
    %c0_4 = arith.constant 0 : index
    %3 = vector.load %arg3[%c0_3, %c0_4] : memref<128x128xf32, #tpu.memory_space<vmem>>, vector<128x128xf32>
    tpu.vector_store %arg3[%c0_3, %c0_4], %2 {strides = array<i32>} : memref<128x128xf32, #tpu.memory_space<vmem>>, vector<128x128xf32>,
    return
  }
  func.func @transform_0(%arg0: i32) -> (i32, i32) {
    %c0_i32 = arith.constant 0 : i32
    %c0_i32_0 = arith.constant 0 : i32
    return %arg0, %c0_i32 : i32, i32
  }
  func.func @transform_1(%arg0: i32) -> (i32, i32) {
    %c0_i32 = arith.constant 0 : i32
    %c0_i32_0 = arith.constant 0 : i32
    %c0_i32_1 = arith.constant 0 : i32
    return %c0_i32, %c0_i32_0 : i32, i32
  }
  func.func @transform_2(%arg0: i32) -> (i32, i32) {
    %c0_i32 = arith.constant 0 : i32
    %c0_i32_0 = arith.constant 0 : i32
    return %arg0, %c0_i32 : i32, i32
  }
}

</mosaic_0001>

<llo_original>
// kernel: tpu_custom_call.1
$region0: #{tpu_custom_call.1}
  #allocation0 [shape = 'u32[]', space=smem, size = 0x4, offset = 0x4, fixed_abs, tag = 'smem constant byte address 0x4 - core index']
  #allocation1 [shape = 'u32[72,128]{1,0:T(1,128)}', space=vmem, size = 0x9000, scoped, tag = 'internal scratch']
  %s0 = inlined_call_operand.hbm [shape: f32[128,128], index: 0, kind: input, shape index: {}]
  %s1 = inlined_call_operand.hbm [shape: f32[128,128], index: 1, kind: input, shape index: {}]
  %s2 = inlined_call_operand.hbm [shape: f32[128,128], index: 2, kind: output, shape index: {}]
  %s3 = sld [smem:[#allocation0]]
  $region26: #{tpu_custom_call.1} parent=0
    _
  %s5 = ssub.s32 1, %s3
  %s6 = scalar_select 0, %s5, %s3
  $region1: #{tpu_custom_call.1} parent=0
    #allocation2 [shape = 'u8[65536]{0}', space=vmem, size = 0x10000, scoped, tag = 'input window, operand 0, single buffered']
    #allocation3 [shape = 's32[1]{0}', space=sflag, size = 0x4, scoped, tag = 'scoped memory for tpu_custom_call.1']
    #allocation4 [shape = 's32[1]{0}', space=sflag, size = 0x4, scoped, tag = 'scoped memory for tpu_custom_call.1']
    #allocation5 [shape = 'u8[65536]{0}', space=vmem, size = 0x10000, scoped, tag = 'input window, operand 1, single buffered']
    #allocation6 [shape = 's32[1]{0}', space=sflag, size = 0x4, scoped, tag = 'scoped memory for tpu_custom_call.1']
    #allocation7 [shape = 'u8[65536]{0}', space=vmem, size = 0x10000, scoped, tag = 'output window, operand 0, single buffered']
    %7 = vsyncpa [#allocation3], 0
    %8 = vsyncpa [#allocation6], 0
    %9 = vsyncpa [#allocation4], 0
    // Predicated region
    $region2: #{tpu_custom_call.1} parent=1 // pred_check
      _
    $region3: #{tpu_custom_call.1} parent=1 // pred_check_branch
      %11 = sbr.rel (0) target = $region5
    $region4: #{tpu_custom_call.1} parent=1 // pred_region
      %13 = vsyncadd [#allocation3], 0
      %s14 = sshll.u32 %s0, 4
      %s15 = int_to_ptr.hbm [resolvable:$true] %s14
      %s16 = sshll.u32 [#allocation2], 4
      %s17 = int_to_ptr.vmem [resolvable:$true] %s16
      %22 = dma.hbm_to_vmem [thread:$0]  %s15, 2048, %s17, [#allocation3], 128, 128, 8
    $region5: #{tpu_custom_call.1} parent=1 // pred_fallthru
      _
    // Predicated region
    $region6: #{tpu_custom_call.1} parent=1 // pred_check
      _
    $region7: #{tpu_custom_call.1} parent=1 // pred_check_branch
      %24 = sbr.rel (0) target = $region9
    $region8: #{tpu_custom_call.1} parent=1 // pred_region
      %26 = vsyncadd [#allocation6], 0
      %s27 = sshll.u32 %s1, 4
      %s28 = int_to_ptr.hbm [resolvable:$true] %s27
      %s29 = sshll.u32 [#allocation5], 4
      %s30 = int_to_ptr.vmem [resolvable:$true] %s29
      %35 = dma.hbm_to_vmem [thread:$0]  %s28, 2048, %s30, [#allocation6], 128, 128, 8
    $region9: #{tpu_custom_call.1} parent=1 // pred_fallthru
      _
    // Predicated region
    $region10: #{tpu_custom_call.1} parent=1 // pred_check
      _
    $region11: #{tpu_custom_call.1} parent=1 // pred_check_branch
      %37 = sbr.rel (0) target = $region13
    $region12: #{tpu_custom_call.1} parent=1 // pred_region
      %39 = dma.done [#allocation3], 2048
    $region13: #{tpu_custom_call.1} parent=1 // pred_fallthru
      _
    // Predicated region
    $region14: #{tpu_custom_call.1} parent=1 // pred_check
      _
    $region15: #{tpu_custom_call.1} parent=1 // pred_check_branch
      %41 = sbr.rel (0) target = $region17
    $region16: #{tpu_custom_call.1} parent=1 // pred_region
      %43 = dma.done [#allocation6], 2048
    $region17: #{tpu_custom_call.1} parent=1 // pred_fallthru
      _
    %v44 = vld [vmem:[#allocation2] sm:$0xff]
    %v45 = vld [vmem:[#allocation2 + $0x8] sm:$0xff]
    %v46 = vld [vmem:[#allocation2 + $0x10] sm:$0xff]
    %v47 = vld [vmem:[#allocation2 + $0x18] sm:$0xff]
    %v48 = vld [vmem:[#allocation2 + $0x20] sm:$0xff]
    %v49 = vld [vmem:[#allocation2 + $0x28] sm:$0xff]
    %v50 = vld [vmem:[#allocation2 + $0x30] sm:$0xff]
    %v51 = vld [vmem:[#allocation2 + $0x38] sm:$0xff]
    %v52 = vld [vmem:[#allocation2 + $0x40] sm:$0xff]
    %v53 = vld [vmem:[#allocation2 + $0x48] sm:$0xff]
    %v54 = vld [vmem:[#allocation2 + $0x50] sm:$0xff]
    %v55 = vld [vmem:[#allocation2 + $0x58] sm:$0xff]
    %v56 = vld [vmem:[#allocation2 + $0x60] sm:$0xff]
    %v57 = vld [vmem:[#allocation2 + $0x68] sm:$0xff]
    %v58 = vld [vmem:[#allocation2 + $0x70] sm:$0xff]
    %v59 = vld [vmem:[#allocation2 + $0x78] sm:$0xff]
    %v60 = vld [vmem:[#allocation5] sm:$0xff]
    %v61 = vld [vmem:[#allocation5 + $0x8] sm:$0xff]
    %v62 = vld [vmem:[#allocation5 + $0x10] sm:$0xff]
    %v63 = vld [vmem:[#allocation5 + $0x18] sm:$0xff]
    %v64 = vld [vmem:[#allocation5 + $0x20] sm:$0xff]
    %v65 = vld [vmem:[#allocation5 + $0x28] sm:$0xff]
    %v66 = vld [vmem:[#allocation5 + $0x30] sm:$0xff]
    %v67 = vld [vmem:[#allocation5 + $0x38] sm:$0xff]
    %v68 = vld [vmem:[#allocation5 + $0x40] sm:$0xff]
    %v69 = vld [vmem:[#allocation5 + $0x48] sm:$0xff]
    %v70 = vld [vmem:[#allocation5 + $0x50] sm:$0xff]
    %v71 = vld [vmem:[#allocation5 + $0x58] sm:$0xff]
    %v72 = vld [vmem:[#allocation5 + $0x60] sm:$0xff]
    %v73 = vld [vmem:[#allocation5 + $0x68] sm:$0xff]
    %v74 = vld [vmem:[#allocation5 + $0x70] sm:$0xff]
    %v75 = vld [vmem:[#allocation5 + $0x78] sm:$0xff]
    %76 = vmatpush.msra.mxu0 %v75
    %77 = vmatpush.msra.mxu0 %v74
    %78 = vmatpush.msra.mxu0 %v73
    %79 = vmatpush.msra.mxu0 %v72
    %80 = vmatpush.msra.mxu0 %v71
    %81 = vmatpush.msra.mxu0 %v70
    %82 = vmatpush.msra.mxu0 %v69
    %83 = vmatpush.msra.mxu0 %v68
    %84 = vmatpush.msra.mxu0 %v67
    %85 = vmatpush.msra.mxu0 %v66
    %86 = vmatpush.msra.mxu0 %v65
    %87 = vmatpush.msra.mxu0 %v64
    %88 = vmatpush.msra.mxu0 %v63
    %89 = vmatpush.msra.mxu0 %v62
    %90 = vmatpush.msra.mxu0 %v61
    %91 = vmatpush.msra.mxu0 %v60
    %92 = vmatmul.f32.gmra.mxu0 %v44
    %v93 = vpop.f32.mrf.mxu0
    %v94 = vadd.f32 0.0, %v93
    %95 = vmatmul.f32.gmra.mxu0 %v45
    %v96 = vpop.f32.mrf.mxu0
    %v97 = vadd.f32 0.0, %v96
    %98 = vmatmul.f32.gmra.mxu0 %v46
    %v99 = vpop.f32.mrf.mxu0
    %v100 = vadd.f32 0.0, %v99
    %101 = vmatmul.f32.gmra.mxu0 %v47
    %v102 = vpop.f32.mrf.mxu0
    %v103 = vadd.f32 0.0, %v102
    %104 = vmatmul.f32.gmra.mxu0 %v48
    %v105 = vpop.f32.mrf.mxu0
    %v106 = vadd.f32 0.0, %v105
    %107 = vmatmul.f32.gmra.mxu0 %v49
    %v108 = vpop.f32.mrf.mxu0
    %v109 = vadd.f32 0.0, %v108
    %110 = vmatmul.f32.gmra.mxu0 %v50
    %v111 = vpop.f32.mrf.mxu0
    %v112 = vadd.f32 0.0, %v111
    %113 = vmatmul.f32.gmra.mxu0 %v51
    %v114 = vpop.f32.mrf.mxu0
    %v115 = vadd.f32 0.0, %v114
    %116 = vmatmul.f32.gmra.mxu0 %v52
    %v117 = vpop.f32.mrf.mxu0
    %v118 = vadd.f32 0.0, %v117
    %119 = vmatmul.f32.gmra.mxu0 %v53
    %v120 = vpop.f32.mrf.mxu0
    %v121 = vadd.f32 0.0, %v120
    %122 = vmatmul.f32.gmra.mxu0 %v54
    %v123 = vpop.f32.mrf.mxu0
    %v124 = vadd.f32 0.0, %v123
    %125 = vmatmul.f32.gmra.mxu0 %v55
    %v126 = vpop.f32.mrf.mxu0
    %v127 = vadd.f32 0.0, %v126
    %128 = vmatmul.f32.gmra.mxu0 %v56
    %v129 = vpop.f32.mrf.mxu0
    %v130 = vadd.f32 0.0, %v129
    %131 = vmatmul.f32.gmra.mxu0 %v57
    %v132 = vpop.f32.mrf.mxu0
    %v133 = vadd.f32 0.0, %v132
    %134 = vmatmul.f32.gmra.mxu0 %v58
    %v135 = vpop.f32.mrf.mxu0
    %v136 = vadd.f32 0.0, %v135
    %137 = vmatmul.f32.gmra.mxu0 %v59
    %v138 = vpop.f32.mrf.mxu0
    %v139 = vadd.f32 0.0, %v138
    %140 = vdwg.mxu0
    %141 = vst [vmem:[#allocation7] sm:$0xff] %v94
    %142 = vst [vmem:[#allocation7 + $0x8] sm:$0xff] %v97
    %143 = vst [vmem:[#allocation7 + $0x10] sm:$0xff] %v100
    %144 = vst [vmem:[#allocation7 + $0x18] sm:$0xff] %v103
    %145 = vst [vmem:[#allocation7 + $0x20] sm:$0xff] %v106
    %146 = vst [vmem:[#allocation7 + $0x28] sm:$0xff] %v109
    %147 = vst [vmem:[#allocation7 + $0x30] sm:$0xff] %v112
    %148 = vst [vmem:[#allocation7 + $0x38] sm:$0xff] %v115
    %149 = vst [vmem:[#allocation7 + $0x40] sm:$0xff] %v118
    %150 = vst [vmem:[#allocation7 + $0x48] sm:$0xff] %v121
    %151 = vst [vmem:[#allocation7 + $0x50] sm:$0xff] %v124
    %152 = vst [vmem:[#allocation7 + $0x58] sm:$0xff] %v127
    %153 = vst [vmem:[#allocation7 + $0x60] sm:$0xff] %v130
    %154 = vst [vmem:[#allocation7 + $0x68] sm:$0xff] %v133
    %155 = vst [vmem:[#allocation7 + $0x70] sm:$0xff] %v136
    %156 = vst [vmem:[#allocation7 + $0x78] sm:$0xff] %v139
    // Predicated region
    $region18: #{tpu_custom_call.1} parent=1 // pred_check
      _
    $region19: #{tpu_custom_call.1} parent=1 // pred_check_branch
      %158 = sbr.rel (0) target = $region21
    $region20: #{tpu_custom_call.1} parent=1 // pred_region
      %160 = vsyncadd [#allocation4], 0
      %s161 = sshll.u32 [#allocation7], 4
      %s162 = int_to_ptr.vmem [resolvable:$true] %s161
      %s163 = sshll.u32 %s2, 4
      %s164 = int_to_ptr.hbm [resolvable:$true] %s163
      %169 = dma.vmem_to_hbm [thread:$0]  %s162, 2048, %s164, [#allocation4], 128, 128, 8
    $region21: #{tpu_custom_call.1} parent=1 // pred_fallthru
      _
    // Predicated region
    $region22: #{tpu_custom_call.1} parent=1 // pred_check
      _
    $region23: #{tpu_custom_call.1} parent=1 // pred_check_branch
      %171 = sbr.rel (0) target = $region25
    $region24: #{tpu_custom_call.1} parent=1 // pred_region
      %173 = dma.done [#allocation4], 2048
    $region25: #{tpu_custom_call.1} parent=1 // pred_fallthru
      _
    %174 = vsyncpa [#allocation3], 1
    %175 = vsyncpa [#allocation6], 1
    %176 = vsyncpa [#allocation4], 1

</llo_original>
